<compile_context>
chip_gen: v5e
topology: v5e:2x2
jax: 0.10.0
libtpu: 0.0.40
codegen_flags: <defaults>
</compile_context>

<pallas_src>
import functools

import jax
import jax.numpy as jnp
from jax.experimental import pallas as pl
from jax.experimental.pallas import tpu as pltpu


# ----------------------------------------------------------------------------
# Kernels
# ----------------------------------------------------------------------------

def _calayer_fused_kernel(x_ref, w1t_ref, b1_ref, w2t_ref, b2_ref, o_ref,
                          *, inv_hw):
    """Single-pass: pool + gate + scale for Bt batch elements, full (C, HW) tile."""
    # Squeeze (AdaptiveAvgPool2d(1)) with f32 accumulation directly off the
    # input ref -- no full f32 copy of the block is kept live.
    pooled = jnp.sum(x_ref[...].astype(jnp.float32), axis=2) * inv_hw    # (Bt, C)

    # conv_du: 1x1 conv C->Cr (+bias), ReLU, 1x1 conv Cr->C (+bias), Sigmoid.
    # Tiny (Bt,C)@(C,Cr) matmuls; fully hidden under DMA -- left as-is.
    z = jnp.dot(pooled, w1t_ref[...], preferred_element_type=jnp.float32)
    z = jnp.maximum(z + b1_ref[...], 0.0)                                # (Bt, Cr)
    s = jnp.dot(z, w2t_ref[...], preferred_element_type=jnp.float32)
    s = jax.nn.sigmoid(s + b2_ref[...])                                  # (Bt, C)

    # Excite: re-read x and multiply in its native dtype (packed bf16 VALU on
    # v6e/v7x when the input is bf16); cast only on store.
    x = x_ref[...]
    o_ref[...] = (x * s.astype(x.dtype)[:, :, None]).astype(o_ref.dtype)


def _pool_gate_kernel(x_ref, w1t_ref, b1_ref, w2t_ref, b2_ref, gate_ref,
                      acc_ref, *, hw_true, hw_tile):
    """Two-pass, pass 1: HW-tiled pooled-sum accumulation + gate MLP."""
    h = pl.program_id(1)

    @pl.when(h == 0)
    def _():
        acc_ref[...] = jnp.zeros_like(acc_ref)

    x = x_ref[...]                                                        # (1, C, HWt)
    # Mask spatial columns past the true extent (final partial HW tile holds
    # unspecified data).  Zero contribution keeps the pooled sum exact.
    col = h * hw_tile + jax.lax.broadcasted_iota(jnp.int32, x.shape, 2)
    xf = jnp.where(col < hw_true, x.astype(jnp.float32), 0.0)
    acc_ref[...] += jnp.sum(xf, axis=2)                                   # (1, C)

    # Gate recomputed each HW step from the running sum; only the final
    # (complete) value survives the output writeback when the block index
    # changes.  The matmuls are tiny and hidden under the streaming DMA.
    pooled = acc_ref[...] * (1.0 / float(hw_true))
    z = jnp.dot(pooled, w1t_ref[...], preferred_element_type=jnp.float32)
    z = jnp.maximum(z + b1_ref[...], 0.0)
    s = jnp.dot(z, w2t_ref[...], preferred_element_type=jnp.float32)
    gate_ref[...] = jax.nn.sigmoid(s + b2_ref[...])


def _scale_kernel(x_ref, gate_ref, o_ref):
    """Two-pass, pass 2: HW-tiled excite/scale."""
    x = x_ref[...]                                                        # (1, C, HWt)
    s = gate_ref[...].astype(x.dtype)                                     # (1, C)
    o_ref[...] = (x * s[:, :, None]).astype(o_ref.dtype)


# ----------------------------------------------------------------------------
# Tiling / budget helpers
# ----------------------------------------------------------------------------

def _vmem_capacity_bytes(default=64 * 2**20):
    """Physical VMEM per TensorCore; conservative 64 MiB fallback (v7x-safe)."""
    try:
        info = pltpu.get_tpu_info()
        cap = getattr(info, "vmem_capacity_bytes", None)
        if cap:
            return int(cap)
    except Exception:
        pass
    return default


def _pick_batch_tile(B, per_elem_bytes, target_bytes, min_pipeline_bytes=256 * 1024):
    """Largest divisor of B whose per-step (in+out) footprint fits target_bytes,
    preferring >= 2 grid steps (pipelining + v7x megacore) when each step is
    still at least `min_pipeline_bytes`."""
    divisors = [d for d in range(1, B + 1) if B % d == 0]
    fits = [d for d in divisors if d * per_elem_bytes <= target_bytes] or [1]
    bt = max(fits)
    if B // bt < 2:
        split_ok = [d for d in fits
                    if B // d >= 2 and d * per_elem_bytes >= min_pipeline_bytes]
        if split_ok:
            bt = max(split_ok)
    return bt


# ----------------------------------------------------------------------------
# Wrappers
# ----------------------------------------------------------------------------

def _calayer_fused(x_flat, w1t, b1r, w2t, b2r, out_dtype, budget):
    B, C, HW = x_flat.shape
    Cr = w1t.shape[1]
    per_elem = C * HW * (x_flat.dtype.itemsize + jnp.dtype(out_dtype).itemsize)

    # Per-step footprint target scales with VMEM (bigger on 128 MiB v5e/v6e,
    # tighter on 64 MiB v7x); leaves room for double-buffering + temps.
    target = min(16 * 2**20, budget // 4)
    Bt = _pick_batch_tile(B, per_elem, target)
    grid = (B // Bt,)

    kernel = functools.partial(_calayer_fused_kernel, inv_hw=1.0 / float(HW))

    # Blocks use the FULL C and HW extents -> no (8,128)/bf16-packing tiling
    # constraints on C, and only the final partial 128-lane vreg of a ragged
    # HW gets a masked store.
    # (If xprof ever shows exposed DMA at step boundaries, sweep
    #  pipeline_mode=pl.Buffered(3) on the x spec -- VMEM permitting.)
    return pl.pallas_call(
        kernel,
        out_shape=jax.ShapeDtypeStruct((B, C, HW), out_dtype),
        grid_spec=pltpu.PrefetchScalarGridSpec(
            num_scalar_prefetch=0,
            grid=grid,
            in_specs=[
                pl.BlockSpec((Bt, C, HW), lambda b: (b, 0, 0)),
                pl.BlockSpec((C, Cr), lambda b: (0, 0)),
                pl.BlockSpec((1, Cr), lambda b: (0, 0)),
                pl.BlockSpec((Cr, C), lambda b: (0, 0)),
                pl.BlockSpec((1, C), lambda b: (0, 0)),
            ],
            out_specs=pl.BlockSpec((Bt, C, HW), lambda b: (b, 0, 0)),
        ),
        compiler_params=pltpu.CompilerParams(
            dimension_semantics=("parallel",),
            vmem_limit_bytes=int(budget)),
    )(x_flat, w1t, b1r, w2t, b2r)


def _calayer_two_pass(x_flat, w1t, b1r, w2t, b2r, out_dtype, budget, hw_tile):
    """HW-tiled two-pass schedule for very large C*HW (v7x VMEM fit + streaming)."""
    B, C, HW = x_flat.shape
    Cr = w1t.shape[1]
    in_item = x_flat.dtype.itemsize
    out_item = jnp.dtype(out_dtype).itemsize

    if hw_tile is None:
        cols = max(128, (budget // 6) // (C * (in_item + out_item)))
        hw_tile = (cols // 128) * 128
    hw_tile = max(128, (int(hw_tile) // 128) * 128)
    hw_tile = max(128, min(hw_tile, ((HW + 127) // 128) * 128))
    n_hw = pl.cdiv(HW, hw_tile)

    # Pass 1: pooled-sum accumulation over HW tiles + gate.
    gate = pl.pallas_call(
        functools.partial(_pool_gate_kernel, hw_true=HW, hw_tile=hw_tile),
        out_shape=jax.ShapeDtypeStruct((B, C), jnp.float32),
        grid_spec=pltpu.PrefetchScalarGridSpec(
            num_scalar_prefetch=0,
            grid=(B, n_hw),
            in_specs=[
                pl.BlockSpec((1, C, hw_tile), lambda b, h: (b, 0, h)),
                pl.BlockSpec((C, Cr), lambda b, h: (0, 0)),
                pl.BlockSpec((1, Cr), lambda b, h: (0, 0)),
                pl.BlockSpec((Cr, C), lambda b, h: (0, 0)),
                pl.BlockSpec((1, C), lambda b, h: (0, 0)),
            ],
            out_specs=pl.BlockSpec((1, C), lambda b, h: (b, 0)),
            scratch_shapes=[pltpu.VMEM((1, C), jnp.float32)],
        ),
        compiler_params=pltpu.CompilerParams(
            dimension_semantics=("parallel", "arbitrary"),
            vmem_limit_bytes=int(budget)),
    )(x_flat, w1t, b1r, w2t, b2r)

    # Pass 2: stream x again and scale by the per-channel gate.
    out = pl.pallas_call(
        _scale_kernel,
        out_shape=jax.ShapeDtypeStruct((B, C, HW), out_dtype),
        grid_spec=pltpu.PrefetchScalarGridSpec(
            num_scalar_prefetch=0,
            grid=(B, n_hw),
            in_specs=[
                pl.BlockSpec((1, C, hw_tile), lambda b, h: (b, 0, h)),
                pl.BlockSpec((1, C), lambda b, h: (b, 0)),
            ],
            out_specs=pl.BlockSpec((1, C, hw_tile), lambda b, h: (b, 0, h)),
        ),
        compiler_params=pltpu.CompilerParams(
            dimension_semantics=("parallel", "parallel"),
            vmem_limit_bytes=int(budget)),
    )(x_flat, gate)
    return out


def calayer_pallas(x, w1, b1, w2, b2, *, io_dtype=None,
                   force_two_pass=False, hw_tile=None):
    """Channel attention.  x: (B, C, H, W); w1: (Cr, C) [or (Cr,C,1,1)];
    b1: (Cr,); w2: (C, Cr) [or (C,Cr,1,1)]; b2: (C,).
    Returns (B, C, H, W) in `io_dtype` (default: x.dtype).  Input is read in
    its own dtype (pass bf16 x only if it is already bf16 upstream)."""
    B, C, H, W = x.shape
    HW = H * W
    out_dtype = jnp.dtype(io_dtype) if io_dtype is not None else x.dtype

    w1m = jnp.asarray(w1, jnp.float32).reshape(-1, C)      # (Cr, C)
    Cr = w1m.shape[0]
    w2m = jnp.asarray(w2, jnp.float32).reshape(C, Cr)      # (C, Cr)
    w1t = w1m.T                                            # (C, Cr)
    w2t = w2m.T                                            # (Cr, C)
    b1r = jnp.asarray(b1, jnp.float32).reshape(1, Cr)
    b2r = jnp.asarray(b2, jnp.float32).reshape(1, C)

    # Free metadata reshape only -- no pad, no dtype cast (no extra HBM passes).
    x_flat = x.reshape(B, C, HW)

    vmem_cap = _vmem_capacity_bytes()
    budget = min((vmem_cap * 3) // 4, 96 * 2**20)          # ~48 MiB on v7x, 96 MiB on v5e/v6e

    per_elem = C * HW * (x.dtype.itemsize + jnp.dtype(out_dtype).itemsize)
    use_two_pass = force_two_pass or (3 * per_elem > budget)

    if use_two_pass:
        out = _calayer_two_pass(x_flat, w1t, b1r, w2t, b2r, out_dtype, budget, hw_tile)
    else:
        out = _calayer_fused(x_flat, w1t, b1r, w2t, b2r, out_dtype, budget)
    return out.reshape(B, C, H, W)


def calayer_ref(x, w1, b1, w2, b2):
    # Pure-JAX reference mirroring the PyTorch forward (f32).
    pooled = jnp.mean(x.astype(jnp.float32), axis=(2, 3))        # (B, C)
    z = jnp.maximum(pooled @ w1.T + b1, 0.0)                     # (B, Cr)
    s = jax.nn.sigmoid(z @ w2.T + b2)                            # (B, C)
    return x.astype(jnp.float32) * s[:, :, None, None]


# ----------------------------------------------------------------------------
# Self-test
# ----------------------------------------------------------------------------

if __name__ == "__main__":
    key = jax.random.PRNGKey(0)

    def make_inputs(k, B, C, H, W, reduction):
        Cr = C // reduction
        kx, k1, k2, k3, k4 = jax.random.split(k, 5)
        x = jax.random.normal(kx, (B, C, H, W), dtype=jnp.float32)
        w1 = 0.1 * jax.random.normal(k1, (Cr, C), dtype=jnp.float32)
        b1 = 0.1 * jax.random.normal(k2, (Cr,), dtype=jnp.float32)
        w2 = 0.1 * jax.random.normal(k3, (C, Cr), dtype=jnp.float32)
        b2 = 0.1 * jax.random.normal(k4, (C,), dtype=jnp.float32)
        return x, w1, b1, w2, b2

    configs = [
        # (B, C, H, W, reduction, extra kwargs)
        (2, 32, 16, 16, 4, {}),                                    # fused, HW % 128 == 0
        (3, 32, 9, 7, 8, {}),                                      # fused, ragged HW (no pad/slice)
        (2, 32, 64, 64, 4, {}),                                    # fused, >= 2 grid steps
        (2, 32, 24, 24, 4, dict(force_two_pass=True, hw_tile=128)),  # two-pass HW-tiled path
    ]

    for (B, C, H, W, reduction, kwargs) in configs:
        key, sub = jax.random.split(key)
        x, w1, b1, w2, b2 = make_inputs(sub, B, C, H, W, reduction)
        ref = calayer_ref(x, w1, b1, w2, b2)

        out = calayer_pallas(x, w1, b1, w2, b2, **kwargs)
        jax.block_until_ready(out)
        assert out.shape == (B, C, H, W) and out.dtype == x.dtype
        assert jnp.allclose(out, ref, atol=1e-5, rtol=1e-5), \
            f"f32 mismatch at shape {(B, C, H, W)} kwargs={kwargs}"

    # bf16 output (cast on store only; input stays f32, no wrapper cast pass).
    B, C, H, W, reduction, _ = configs[0]
    key, sub = jax.random.split(key)
    x, w1, b1, w2, b2 = make_inputs(sub, B, C, H, W, reduction)
    ref = calayer_ref(x, w1, b1, w2, b2)

    out_bf16 = calayer_pallas(x, w1, b1, w2, b2, io_dtype=jnp.bfloat16)
    jax.block_until_ready(out_bf16)
    assert out_bf16.dtype == jnp.bfloat16
    assert jnp.allclose(out_bf16.astype(jnp.float32), ref, atol=5e-2, rtol=5e-2), \
        "bf16-output mismatch"

    # bf16 input (as if already bf16 upstream): gate math stays f32 in-kernel.
    out_bf16_in = calayer_pallas(x.astype(jnp.bfloat16), w1, b1, w2, b2)
    jax.block_until_ready(out_bf16_in)
    assert out_bf16_in.dtype == jnp.bfloat16
    assert jnp.allclose(out_bf16_in.astype(jnp.float32), ref, atol=5e-2, rtol=5e-2), \
        "bf16-input mismatch"

    print("KERNEL_OK")
</pallas_src>

<mosaic_0001>
module attributes {stable_mosaic.version = 11 : i64} {
  func.func @_calayer_fused_kernel(%arg0: i32, %arg1: memref<2x32x256xf32, #tpu.memory_space<vmem>>, %arg2: memref<32x8xf32, #tpu.memory_space<vmem>>, %arg3: memref<1x8xf32, #tpu.memory_space<vmem>>, %arg4: memref<8x32xf32, #tpu.memory_space<vmem>>, %arg5: memref<1x32xf32, #tpu.memory_space<vmem>>, %arg6: memref<2x32x256xf32, #tpu.memory_space<vmem>>) attributes {dimension_semantics = [#tpu.dimension_semantics<parallel>], iteration_bounds = array<i64: 1>, scalar_prefetch = 0 : i64, scratch_operands = 0 : i64, tpu.core_type = #tpu.core_type<tc>, window_params = [{transform_indices = @transform_0, window_bounds = array<i64: 2, 32, 256>}, {pipeline_mode = #tpu.pipeline_mode<synchronous>, transform_indices = @transform_1, window_bounds = array<i64: 32, 8>}, {pipeline_mode = #tpu.pipeline_mode<synchronous>, transform_indices = @transform_2, window_bounds = array<i64: 1, 8>}, {pipeline_mode = #tpu.pipeline_mode<synchronous>, transform_indices = @transform_3, window_bounds = array<i64: 8, 32>}, {pipeline_mode = #tpu.pipeline_mode<synchronous>, transform_indices = @transform_4, window_bounds = array<i64: 1, 32>}, {transform_indices = @transform_5, window_bounds = array<i64: 2, 32, 256>}]} {
    %c0 = arith.constant 0 : index
    %c0_0 = arith.constant 0 : index
    %c0_1 = arith.constant 0 : index
    %0 = vector.load %arg1[%c0, %c0_0, %c0_1] : memref<2x32x256xf32, #tpu.memory_space<vmem>>, vector<2x32x256xf32>
    %cst = arith.constant dense<0.000000e+00> : vector<2x32xf32>
    %1 = vector.multi_reduction <add>, %0, %cst [2] : vector<2x32x256xf32> to vector<2x32xf32>
    %cst_2 = arith.constant 3.906250e-03 : f32
    %2 = vector.broadcast %cst_2 : f32 to vector<2x32xf32>
    %3 = arith.mulf %1, %2 : vector<2x32xf32>
    %c0_3 = arith.constant 0 : index
    %c0_4 = arith.constant 0 : index
    %4 = vector.load %arg2[%c0_3, %c0_4] : memref<32x8xf32, #tpu.memory_space<vmem>>, vector<32x8xf32>
    %cst_5 = arith.constant dense<0.000000e+00> : vector<2x8xf32>
    %5 = tpu.matmul %3, %4, %cst_5 {dimension_numbers = #tpu.dot_dimension_numbers<[1], [0], [0], [1], [0, 0, 1, 1], [], []>} : vector<2x32xf32>, vector<32x8xf32>, vector<2x8xf32> -> vector<2x8xf32>
    %c0_6 = arith.constant 0 : index
    %c0_7 = arith.constant 0 : index
    %6 = vector.load %arg3[%c0_6, %c0_7] : memref<1x8xf32, #tpu.memory_space<vmem>>, vector<1x8xf32>
    %7 = vector.broadcast %6 : vector<1x8xf32> to vector<2x8xf32>
    %8 = arith.addf %5, %7 : vector<2x8xf32>
    %cst_8 = arith.constant 0.000000e+00 : f32
    %9 = vector.broadcast %cst_8 : f32 to vector<2x8xf32>
    %10 = arith.maximumf %8, %9 : vector<2x8xf32>
    %c0_9 = arith.constant 0 : index
    %c0_10 = arith.constant 0 : index
    %11 = vector.load %arg4[%c0_9, %c0_10] : memref<8x32xf32, #tpu.memory_space<vmem>>, vector<8x32xf32>
    %cst_11 = arith.constant dense<0.000000e+00> : vector<2x32xf32>
    %12 = tpu.matmul %10, %11, %cst_11 {dimension_numbers = #tpu.dot_dimension_numbers<[1], [0], [0], [1], [0, 0, 1, 1], [], []>} : vector<2x8xf32>, vector<8x32xf32>, vector<2x32xf32> -> vector<2x32xf32>
    %c0_12 = arith.constant 0 : index
    %c0_13 = arith.constant 0 : index
    %13 = vector.load %arg5[%c0_12, %c0_13] : memref<1x32xf32, #tpu.memory_space<vmem>>, vector<1x32xf32>
    %14 = vector.broadcast %13 : vector<1x32xf32> to vector<2x32xf32>
    %15 = arith.addf %12, %14 : vector<2x32xf32>
    %16 = arith.negf %15 : vector<2x32xf32>
    %17 = math.exp %16 : vector<2x32xf32>
    %cst_14 = arith.constant 1.000000e+00 : f32
    %18 = vector.broadcast %cst_14 : f32 to vector<2x32xf32>
    %19 = arith.addf %18, %17 : vector<2x32xf32>
    %20 = arith.divf %18, %19 : vector<2x32xf32>
    %c0_15 = arith.constant 0 : index
    %c0_16 = arith.constant 0 : index
    %c0_17 = arith.constant 0 : index
    %21 = vector.load %arg1[%c0_15, %c0_16, %c0_17] : memref<2x32x256xf32, #tpu.memory_space<vmem>>, vector<2x32x256xf32>
    %22 = vector.shape_cast %20 : vector<2x32xf32> to vector<2x32x1xf32>
    %23 = vector.broadcast %22 : vector<2x32x1xf32> to vector<2x32x256xf32>
    %24 = arith.mulf %21, %23 : vector<2x32x256xf32>
    %c0_18 = arith.constant 0 : index
    %c0_19 = arith.constant 0 : index
    %c0_20 = arith.constant 0 : index
    %25 = vector.load %arg6[%c0_18, %c0_19, %c0_20] : memref<2x32x256xf32, #tpu.memory_space<vmem>>, vector<2x32x256xf32>
    tpu.vector_store %arg6[%c0_18, %c0_19, %c0_20], %24 {strides = array<i32>} : memref<2x32x256xf32, #tpu.memory_space<vmem>>, vector<2x32x256xf32>,
    return
  }
  func.func @transform_0(%arg0: i32) -> (i32, i32, i32) {
    %c0_i32 = arith.constant 0 : i32
    %c0_i32_0 = arith.constant 0 : i32
    %c0_i32_1 = arith.constant 0 : i32
    return %arg0, %c0_i32, %c0_i32_0 : i32, i32, i32
  }
  func.func @transform_1(%arg0: i32) -> (i32, i32) {
    %c0_i32 = arith.constant 0 : i32
    %c0_i32_0 = arith.constant 0 : i32
    %c0_i32_1 = arith.constant 0 : i32
    return %c0_i32, %c0_i32_0 : i32, i32
  }
  func.func @transform_2(%arg0: i32) -> (i32, i32) {
    %c0_i32 = arith.constant 0 : i32
    %c0_i32_0 = arith.constant 0 : i32
    %c0_i32_1 = arith.constant 0 : i32
    return %c0_i32, %c0_i32_0 : i32, i32
  }
  func.func @transform_3(%arg0: i32) -> (i32, i32) {
    %c0_i32 = arith.constant 0 : i32
    %c0_i32_0 = arith.constant 0 : i32
    %c0_i32_1 = arith.constant 0 : i32
    return %c0_i32, %c0_i32_0 : i32, i32
  }
  func.func @transform_4(%arg0: i32) -> (i32, i32) {
    %c0_i32 = arith.constant 0 : i32
    %c0_i32_0 = arith.constant 0 : i32
    %c0_i32_1 = arith.constant 0 : i32
    return %c0_i32, %c0_i32_0 : i32, i32
  }
  func.func @transform_5(%arg0: i32) -> (i32, i32, i32) {
    %c0_i32 = arith.constant 0 : i32
    %c0_i32_0 = arith.constant 0 : i32
    %c0_i32_1 = arith.constant 0 : i32
    return %arg0, %c0_i32, %c0_i32_0 : i32, i32, i32
  }
}

</mosaic_0001>

<llo_original>
// kernel: tpu_custom_call.1
$region0: #{tpu_custom_call.1}
  #allocation0 [shape = 'u32[]', space=smem, size = 0x4, offset = 0x4, fixed_abs, tag = 'smem constant byte address 0x4 - core index']
  #allocation1 [shape = 'u32[72,128]{1,0:T(1,128)}', space=vmem, size = 0x9000, scoped, tag = 'internal scratch']
  %s0 = inlined_call_operand.hbm [shape: f32[2,32,256], index: 0, kind: input, shape index: {}]
  %s1 = inlined_call_operand.vmem [shape: f32[32,8], index: 1, kind: input, shape index: {}]
  %s2 = inlined_call_operand.vmem [shape: f32[1,8], index: 2, kind: input, shape index: {}]
  %s3 = inlined_call_operand.vmem [shape: f32[8,32], index: 3, kind: input, shape index: {}]
  %s4 = inlined_call_operand.vmem [shape: f32[1,32], index: 4, kind: input, shape index: {}]
  %s5 = inlined_call_operand.hbm [shape: f32[2,32,256], index: 5, kind: output, shape index: {}]
  %s6 = sld [smem:[#allocation0]]
  $region34: #{tpu_custom_call.1} parent=0
    _
  %s8 = ssub.s32 1, %s6
  %s9 = scalar_select 0, %s8, %s6
  $region1: #{tpu_custom_call.1} parent=0
    #allocation2 [shape = 'u8[65536]{0}', space=vmem, size = 0x10000, scoped, tag = 'input window, operand 0, single buffered']
    #allocation3 [shape = 's32[1]{0}', space=sflag, size = 0x4, scoped, tag = 'scoped memory for tpu_custom_call.1']
    #allocation4 [shape = 's32[1]{0}', space=sflag, size = 0x4, scoped, tag = 'scoped memory for tpu_custom_call.1']
    #allocation5 [shape = 'u8[65536]{0}', space=vmem, size = 0x10000, scoped, tag = 'output window, operand 0, single buffered']
    %10 = vsyncpa [#allocation3], 0
    %11 = vsyncpa [#allocation4], 0
    // Predicated region
    $region2: #{tpu_custom_call.1} parent=1 // pred_check
      _
    $region3: #{tpu_custom_call.1} parent=1 // pred_check_branch
      %13 = sbr.rel (0) target = $region5
    $region4: #{tpu_custom_call.1} parent=1 // pred_region
      %15 = vsyncadd [#allocation3], 0
      %s16 = sshll.u32 %s0, 4
      %s17 = int_to_ptr.hbm [resolvable:$true] %s16
      %s18 = sshll.u32 [#allocation2], 4
      %s19 = int_to_ptr.vmem [resolvable:$true] %s18
      %24 = dma.hbm_to_vmem [thread:$0]  %s17, 2048, %s19, [#allocation3], 256, 256, 16
    $region5: #{tpu_custom_call.1} parent=1 // pred_fallthru
      _
    // Predicated region
    $region6: #{tpu_custom_call.1} parent=1 // pred_check
      _
    $region7: #{tpu_custom_call.1} parent=1 // pred_check_branch
      %26 = sbr.rel (0) target = $region9
    $region8: #{tpu_custom_call.1} parent=1 // pred_region
      _
    $region9: #{tpu_custom_call.1} parent=1 // pred_fallthru
      _
    // Predicated region
    $region10: #{tpu_custom_call.1} parent=1 // pred_check
      _
    $region11: #{tpu_custom_call.1} parent=1 // pred_check_branch
      %28 = sbr.rel (0) target = $region13
    $region12: #{tpu_custom_call.1} parent=1 // pred_region
      _
    $region13: #{tpu_custom_call.1} parent=1 // pred_fallthru
      _
    // Predicated region
    $region14: #{tpu_custom_call.1} parent=1 // pred_check
      _
    $region15: #{tpu_custom_call.1} parent=1 // pred_check_branch
      %30 = sbr.rel (0) target = $region17
    $region16: #{tpu_custom_call.1} parent=1 // pred_region
      _
    $region17: #{tpu_custom_call.1} parent=1 // pred_fallthru
      _
    // Predicated region
    $region18: #{tpu_custom_call.1} parent=1 // pred_check
      _
    $region19: #{tpu_custom_call.1} parent=1 // pred_check_branch
      %32 = sbr.rel (0) target = $region21
    $region20: #{tpu_custom_call.1} parent=1 // pred_region
      _
    $region21: #{tpu_custom_call.1} parent=1 // pred_fallthru
      _
    // Predicated region
    $region22: #{tpu_custom_call.1} parent=1 // pred_check
      _
    $region23: #{tpu_custom_call.1} parent=1 // pred_check_branch
      %34 = sbr.rel (0) target = $region25
    $region24: #{tpu_custom_call.1} parent=1 // pred_region
      %36 = dma.done [#allocation3], 2048
    $region25: #{tpu_custom_call.1} parent=1 // pred_fallthru
      _
    %v37 = vld [vmem:[#allocation2] sm:$0xff]
    %v38 = vld [vmem:[#allocation2 + $0x8] sm:$0xff]
    %v39 = vld [vmem:[#allocation2 + $0x10] sm:$0xff]
    %v40 = vld [vmem:[#allocation2 + $0x18] sm:$0xff]
    %v41 = vld [vmem:[#allocation2 + $0x20] sm:$0xff]
    %v42 = vld [vmem:[#allocation2 + $0x28] sm:$0xff]
    %v43 = vld [vmem:[#allocation2 + $0x30] sm:$0xff]
    %v44 = vld [vmem:[#allocation2 + $0x38] sm:$0xff]
    %v45 = vld [vmem:[#allocation2 + $0x40] sm:$0xff]
    %v46 = vld [vmem:[#allocation2 + $0x48] sm:$0xff]
    %v47 = vld [vmem:[#allocation2 + $0x50] sm:$0xff]
    %v48 = vld [vmem:[#allocation2 + $0x58] sm:$0xff]
    %v49 = vld [vmem:[#allocation2 + $0x60] sm:$0xff]
    %v50 = vld [vmem:[#allocation2 + $0x68] sm:$0xff]
    %v51 = vld [vmem:[#allocation2 + $0x70] sm:$0xff]
    %v52 = vld [vmem:[#allocation2 + $0x78] sm:$0xff]
    %v53 = vadd.f32 %v37, %v38
    %54 = vadd.xlane.f32.xlu0 %v53
    %v55 = vpop.xlane.xlu0 %54
    %v56 = vadd.f32 %v39, %v40
    %57 = vadd.xlane.f32.xlu0 %v56
    %v58 = vpop.xlane.xlu0 %57
    %v59 = vadd.f32 %v41, %v42
    %60 = vadd.xlane.f32.xlu0 %v59
    %v61 = vpop.xlane.xlu0 %60
    %v62 = vadd.f32 %v43, %v44
    %63 = vadd.xlane.f32.xlu0 %v62
    %v64 = vpop.xlane.xlu0 %63
    %v65 = vadd.f32 %v45, %v46
    %66 = vadd.xlane.f32.xlu0 %v65
    %v67 = vpop.xlane.xlu0 %66
    %v68 = vadd.f32 %v47, %v48
    %69 = vadd.xlane.f32.xlu0 %v68
    %v70 = vpop.xlane.xlu0 %69
    %v71 = vadd.f32 %v49, %v50
    %72 = vadd.xlane.f32.xlu0 %v71
    %v73 = vpop.xlane.xlu0 %72
    %v74 = vadd.f32 %v51, %v52
    %75 = vadd.xlane.f32.xlu0 %v74
    %v76 = vpop.xlane.xlu0 %75
    %v77 = vmul.f32 %v55, 0.00390625
    %v78 = vmul.f32 %v58, 0.00390625
    %v79 = vmul.f32 %v61, 0.00390625
    %v80 = vmul.f32 %v64, 0.00390625
    %v81 = vmul.f32 %v67, 0.00390625
    %v82 = vmul.f32 %v70, 0.00390625
    %v83 = vmul.f32 %v73, 0.00390625
    %v84 = vmul.f32 %v76, 0.00390625
    %v85 = vld [vmem:[%s1] sm:$0xff]
    %v86 = vld [vmem:[%s1 + $0x8] sm:$0xff]
    %v87 = vld [vmem:[%s1 + $0x10] sm:$0xff]
    %v88 = vld [vmem:[%s1 + $0x18] sm:$0xff]
    %v89 = vld [vmem:[%s2] sm:$0x1]
    %v91 = vperm.slane %v89, 0
    %v101 = vlaneseq
    %v102 = vand.u32 %v101, 127
    %v103 = vperm.slane %v77, %v102
    %v104 = vadd.s32 %v102, 4294967288
    %v105 = vperm.slane %v78, %v104
    %vm106 = vcmask 130112
    %v107 = vsel %vm106, %v105, %v103
    %v108 = vadd.s32 %v102, 4294967280
    %v109 = vperm.slane %v79, %v108
    %vm110 = vcmask 195712
    %v111 = vsel %vm110, %v109, %v107
    %v112 = vadd.s32 %v102, 4294967272
    %v113 = vperm.slane %v80, %v112
    %vm114 = vcmask 261312
    %v115 = vsel %vm114, %v113, %v111
    %v116 = vperm.slane %v81, %v102
    %v117 = vperm.slane %v82, %v104
    %v118 = vsel %vm106, %v117, %v116
    %v119 = vperm.slane %v83, %v108
    %v120 = vsel %vm110, %v119, %v118
    %v121 = vperm.slane %v84, %v112
    %v122 = vsel %vm114, %v121, %v120
    %vm123 = vcmask 1041409
    %v124 = vsel %vm123, %v122, %v115
    %vm125 = vcmask 261120
    %v126 = vsel %vm125, %v124, 0
    %128 = vmatpush.msra.mxu0 0.0
    %129 = vmatpush.msra.mxu0 0.0
    %130 = vmatpush.msra.mxu0 0.0
    %131 = vmatpush.msra.mxu0 0.0
    %132 = vmatpush.msra.mxu0 0.0
    %133 = vmatpush.msra.mxu0 0.0
    %134 = vmatpush.msra.mxu0 0.0
    %135 = vmatpush.msra.mxu0 0.0
    %136 = vmatpush.msra.mxu0 0.0
    %137 = vmatpush.msra.mxu0 0.0
    %138 = vmatpush.msra.mxu0 0.0
    %139 = vmatpush.msra.mxu0 0.0
    %140 = vmatpush.msra.mxu0 %v88
    %141 = vmatpush.msra.mxu0 %v87
    %142 = vmatpush.msra.mxu0 %v86
    %143 = vmatpush.msra.mxu0 %v85
    %144 = vmatmul.f32.gmra.mxu0 %v126
    %v145 = vpop.f32.mrf.mxu0
    %v146 = vadd.f32 %v91, %v145
    %147 = vdwg.mxu0
    %v148 = vmax.f32 %v146, 0.0
    %v149 = vld [vmem:[%s3] sm:$0xff]
    %v150 = vld [vmem:[%s4] sm:$0x1]
    %v152 = vperm.slane %v150, 0
    %vm154 = vcmask 64512
    %v156 = vsel %vm154, %v148, 0
    %158 = vmatpush.msra.mxu0 0.0
    %159 = vmatpush.msra.mxu0 0.0
    %160 = vmatpush.msra.mxu0 0.0
    %161 = vmatpush.msra.mxu0 0.0
    %162 = vmatpush.msra.mxu0 0.0
    %163 = vmatpush.msra.mxu0 0.0
    %164 = vmatpush.msra.mxu0 0.0
    %165 = vmatpush.msra.mxu0 0.0
    %166 = vmatpush.msra.mxu0 0.0
    %167 = vmatpush.msra.mxu0 0.0
    %168 = vmatpush.msra.mxu0 0.0
    %169 = vmatpush.msra.mxu0 0.0
    %170 = vmatpush.msra.mxu0 0.0
    %171 = vmatpush.msra.mxu0 0.0
    %172 = vmatpush.msra.mxu0 0.0
    %173 = vmatpush.msra.mxu0 %v149
    %174 = vmatmul.f32.gmra.mxu0 %v156
    %v175 = vpop.f32.mrf.mxu0
    %v176 = vadd.f32 %v152, %v175
    %177 = vdwg.mxu0
    %v178 = vxor.u32 %v176, 2147483648
    %v179 = vmul.f32 %v178, 1.442695
    %v180 = vpow.pop %v179
    %v181 = vadd.f32 %v180, 1.0
    %v182 = vrcp.pop %v181
    %v183 = vmul.f32 %v181, %v182
    %v184 = vsub.f32 1.0, %v183
    %v185 = vmul.f32 %v182, %v184
    %v186 = vadd.f32 %v182, %v185
    %vm187 = vweird.f32 %v181
    %vm188 = vweird.f32 %v182
    %vm189 = vmor %vm187, %vm188
    %v190 = vsel %vm189, %v182, %v186
    %v191 = vand.u32 2147483647, %v181
    %vm192 = vcmp.eq.f32.partialorder %v191, 8.507059e+37
    %v193 = vand.u32 %v181, 2147483648
    %v194 = vor.u32 1.1754944e-38, %v193
    %v195 = vsel %vm192, %v194, %v190
    %v196 = vmul.f32 1.0, %v195
    %v197 = vperm.slane %v196, 0
    %v198 = vlaneseq
    %v199 = vshrl.u32 %v198, 7
    %201 = vset.pattern.permute.xlu0 %v199
    %202 = vperm.xlu0 %201, %v197
    %v203 = vpop.permute.xlu0 %202
    %v204 = vlaneseq
    %v205 = vshrl.u32 %v204, 7
    %v206 = vadd.s32 %v205, 8
    %207 = vset.pattern.permute.xlu0 %v206
    %208 = vperm.xlu0 %207, %v197
    %v209 = vpop.permute.xlu0 %208
    %v210 = vlaneseq
    %v211 = vshrl.u32 %v210, 7
    %v212 = vadd.s32 %v211, 16
    %213 = vset.pattern.permute.xlu0 %v212
    %214 = vperm.xlu0 %213, %v197
    %v215 = vpop.permute.xlu0 %214
    %v216 = vlaneseq
    %v217 = vshrl.u32 %v216, 7
    %v218 = vadd.s32 %v217, 24
    %219 = vset.pattern.permute.xlu0 %v218
    %220 = vperm.xlu0 %219, %v197
    %v221 = vpop.permute.xlu0 %220
    %v222 = vperm.slane %v196, 1
    %v223 = vlaneseq
    %v224 = vshrl.u32 %v223, 7
    %226 = vset.pattern.permute.xlu0 %v224
    %227 = vperm.xlu0 %226, %v222
    %v228 = vpop.permute.xlu0 %227
    %v229 = vlaneseq
    %v230 = vshrl.u32 %v229, 7
    %v231 = vadd.s32 %v230, 8
    %232 = vset.pattern.permute.xlu0 %v231
    %233 = vperm.xlu0 %232, %v222
    %v234 = vpop.permute.xlu0 %233
    %v235 = vlaneseq
    %v236 = vshrl.u32 %v235, 7
    %v237 = vadd.s32 %v236, 16
    %238 = vset.pattern.permute.xlu0 %v237
    %239 = vperm.xlu0 %238, %v222
    %v240 = vpop.permute.xlu0 %239
    %v241 = vlaneseq
    %v242 = vshrl.u32 %v241, 7
    %v243 = vadd.s32 %v242, 24
    %244 = vset.pattern.permute.xlu0 %v243
    %245 = vperm.xlu0 %244, %v222
    %v246 = vpop.permute.xlu0 %245
    %v247 = vmul.f32 %v37, %v203
    %v248 = vmul.f32 %v38, %v203
    %v249 = vmul.f32 %v39, %v209
    %v250 = vmul.f32 %v40, %v209
    %v251 = vmul.f32 %v41, %v215
    %v252 = vmul.f32 %v42, %v215
    %v253 = vmul.f32 %v43, %v221
    %v254 = vmul.f32 %v44, %v221
    %v255 = vmul.f32 %v45, %v228
    %v256 = vmul.f32 %v46, %v228
    %v257 = vmul.f32 %v47, %v234
    %v258 = vmul.f32 %v48, %v234
    %v259 = vmul.f32 %v49, %v240
    %v260 = vmul.f32 %v50, %v240
    %v261 = vmul.f32 %v51, %v246
    %v262 = vmul.f32 %v52, %v246
    %263 = vst [vmem:[#allocation5] sm:$0xff] %v247
    %264 = vst [vmem:[#allocation5 + $0x8] sm:$0xff] %v248
    %265 = vst [vmem:[#allocation5 + $0x10] sm:$0xff] %v249
    %266 = vst [vmem:[#allocation5 + $0x18] sm:$0xff] %v250
    %267 = vst [vmem:[#allocation5 + $0x20] sm:$0xff] %v251
    %268 = vst [vmem:[#allocation5 + $0x28] sm:$0xff] %v252
    %269 = vst [vmem:[#allocation5 + $0x30] sm:$0xff] %v253
    %270 = vst [vmem:[#allocation5 + $0x38] sm:$0xff] %v254
    %271 = vst [vmem:[#allocation5 + $0x40] sm:$0xff] %v255
    %272 = vst [vmem:[#allocation5 + $0x48] sm:$0xff] %v256
    %273 = vst [vmem:[#allocation5 + $0x50] sm:$0xff] %v257
    %274 = vst [vmem:[#allocation5 + $0x58] sm:$0xff] %v258
    %275 = vst [vmem:[#allocation5 + $0x60] sm:$0xff] %v259
    %276 = vst [vmem:[#allocation5 + $0x68] sm:$0xff] %v260
    %277 = vst [vmem:[#allocation5 + $0x70] sm:$0xff] %v261
    %278 = vst [vmem:[#allocation5 + $0x78] sm:$0xff] %v262
    // Predicated region
    $region26: #{tpu_custom_call.1} parent=1 // pred_check
      _
    $region27: #{tpu_custom_call.1} parent=1 // pred_check_branch
      %280 = sbr.rel (0) target = $region29
    $region28: #{tpu_custom_call.1} parent=1 // pred_region
      %282 = vsyncadd [#allocation4], 0
      %s283 = sshll.u32 [#allocation5], 4
      %s284 = int_to_ptr.vmem [resolvable:$true] %s283
      %s285 = sshll.u32 %s5, 4
      %s286 = int_to_ptr.hbm [resolvable:$true] %s285
      %291 = dma.vmem_to_hbm [thread:$0]  %s284, 2048, %s286, [#allocation4], 256, 256, 16
    $region29: #{tpu_custom_call.1} parent=1 // pred_fallthru
      _
    // Predicated region
    $region30: #{tpu_custom_call.1} parent=1 // pred_check
      _
    $region31: #{tpu_custom_call.1} parent=1 // pred_check_branch
      %293 = sbr.rel (0) target = $region33
    $region32: #{tpu_custom_call.1} parent=1 // pred_region
      %295 = dma.done [#allocation4], 2048
    $region33: #{tpu_custom_call.1} parent=1 // pred_fallthru
      _
    %296 = vsyncpa [#allocation3], 1
    %297 = vsyncpa [#allocation4], 1

</llo_original>
